<compile_context>
chip_gen: v6e
topology: v6e:2x2x1
jax: 0.10.0
libtpu: 0.0.40
codegen_flags: <defaults>
</compile_context>

<pallas_src>
import math

import jax
import jax.numpy as jnp
from jax.experimental import pallas as pl
from jax.experimental.pallas import tpu as pltpu


def _fnet_embed_kernel(x_ref, w_ref, pe_ref, o_ref):
    # x_ref:  (lt, Kg)  rows of [x_{t-1} | x_t | x_{t+1}] (circular; possibly G-row-grouped)
    # w_ref:  (Kg, Dg)  stacked conv taps (block-diagonal when G > 1); VMEM-resident
    # pe_ref: (lt, Dg)  positional encoding + conv bias; fetched once per seq tile
    # o_ref:  (lt, Dg)
    acc = jnp.dot(x_ref[...], w_ref[...], preferred_element_type=jnp.float32)
    o_ref[...] = (acc + pe_ref[...].astype(jnp.float32)).astype(o_ref.dtype)


def _round_up(n, m):
    return ((n + m - 1) // m) * m


def _vmem_capacity_bytes():
    try:
        return int(pltpu.get_tpu_info().vmem_capacity_bytes)
    except Exception:
        return 64 * 1024 * 1024  # conservative default: v7x per-TensorCore VMEM


def _choose_seq_tile(Lg, B, target_rows):
    """Largest multiple-of-8 divisor of Lg <= target_rows, nudged so the total grid
    (Lg // lt) * B has >= 2 steps and (cheaply) an even step count."""
    divisors = [t for t in range(8, Lg + 1, 8) if Lg % t == 0]
    if not divisors:
        return Lg
    target = max(8, target_rows)
    cands = [t for t in divisors if t <= target] or [min(divisors)]
    lt = max(cands)

    def steps(t):
        return (Lg // t) * B

    # keep >= 2 grid steps (double-buffered pipeline + second v7x TensorCore)
    if steps(lt) < 2:
        smaller = [t for t in divisors if t < lt]
        if smaller:
            lt = max(smaller)
    # prefer an even total step count when it costs at most halving the tile
    if steps(lt) % 2 == 1:
        even = [t for t in divisors if t <= lt and steps(t) % 2 == 0 and 2 * t >= lt]
        if even:
            lt = max(even)
    return lt


def fnet_embedding(x, conv_weight, conv_bias, pe, *, out_dtype=None):
    """FNetEmbedding.forward.

    x:           [B, L, C]   input series
    conv_weight: [D, C, 3]   PyTorch Conv1d weight (kernel_size=3, circular 'same' padding)
    conv_bias:   [D]
    pe:          [L, D]      sinusoidal positional encoding (PositionalEmbedding.pe[0, :L])
    returns      [B, L, D]
    """
    B, L, C = x.shape
    D = conv_weight.shape[0]
    out_dtype = jnp.dtype(out_dtype) if out_dtype is not None else x.dtype

    # ---- circular k=3 conv as one matmul: rows of [x_{t-1} | x_t | x_{t+1}] --------------
    x3 = jnp.concatenate(
        [jnp.roll(x, 1, axis=1), x, jnp.roll(x, -1, axis=1)], axis=-1
    ).astype(x.dtype)                                                  # [B, L, 3C]
    # [D, C, 3] -> tap-major [3C, D], matching the concat order above.
    w = jnp.transpose(conv_weight, (2, 1, 0)).reshape(3 * C, D).astype(x.dtype)
    # Fold conv bias into pe (one in-kernel add, one fewer operand); keep pe in x.dtype so a
    # bf16 activation path also halves the pe stream.
    pe_b = (pe.astype(jnp.float32) + conv_bias.astype(jnp.float32)[None, :]).astype(x.dtype)

    # ---- lane-dense row grouping for small d_model (avoid masked vst on sub-128 lanes) ----
    G = 1
    if D < 128 and 128 % D == 0:
        g = 128 // D
        if _round_up(L, 8 * g) <= max(int(1.25 * L), L + 8):  # keep pad overhead small
            G = g

    # ---- pad L so the grid always tiles cleanly (no 1-step whole-array fallback) ----------
    L_pad = _round_up(L, 8 * G)
    if L_pad != L:
        x3 = jnp.pad(x3, ((0, 0), (0, L_pad - L), (0, 0)))
        pe_b = jnp.pad(pe_b, ((0, L_pad - L), (0, 0)))

    Lg, Kg, Dg = L_pad // G, G * 3 * C, G * D
    Mg = B * Lg

    # Row-major bit-identical regroupings (no data movement beyond the pad above).
    x3g = x3.reshape(Mg, Kg)
    pe_g = pe_b.reshape(Lg, Dg)
    wg = w if G == 1 else jnp.kron(jnp.eye(G, dtype=w.dtype), w)       # block-diagonal [Kg, Dg]

    # ---- tiling: grid = (seq_tiles, batch); seq is OUTER so pe is fetched only once -------
    x_item = jnp.dtype(x.dtype).itemsize
    out_item = out_dtype.itemsize
    vmem_cap = _vmem_capacity_bytes()
    # Conservative VMEM accounting: 2 buffers per operand, (8,128)-padded tiles.
    w_bytes = 2 * _round_up(Kg, 8) * _round_up(Dg, 128) * x_item
    row_bytes = 2 * (_round_up(Kg, 128) * x_item
                     + _round_up(Dg, 128) * (x_item + out_item))
    budget = 0.4 * vmem_cap - w_bytes
    target_rows = int(max(8, min(2048, budget // max(row_bytes, 1))))
    lt = _choose_seq_tile(Lg, B, target_rows)
    n_l = Lg // lt
    grid = (n_l, B)

    est_vmem = w_bytes + _round_up(lt, 8) * row_bytes
    cp_kwargs = dict(dimension_semantics=("parallel", "parallel"))
    if est_vmem > 12 * 1024 * 1024:
        # Raise the scoped-VMEM limit only when large tiles need it; never above 50% of the
        # physical capacity (leave headroom for compiler scratch; v7x has only 64 MiB per TC).
        cp_kwargs["vmem_limit_bytes"] = int(
            min(max(2 * est_vmem, 32 * 1024 * 1024), 0.5 * vmem_cap))

    cost = pl.CostEstimate(
        flops=2 * Mg * Kg * Dg,
        transcendentals=0,
        bytes_accessed=(x3g.size * x_item + wg.size * x_item
                        + pe_g.size * x_item + Mg * Dg * out_item),
    )

    out = pl.pallas_call(
        _fnet_embed_kernel,
        out_shape=jax.ShapeDtypeStruct((Mg, Dg), out_dtype),
        grid_spec=pltpu.PrefetchScalarGridSpec(
            num_scalar_prefetch=0,
            grid=grid,
            in_specs=[
                pl.BlockSpec((lt, Kg), lambda l, b: (b * n_l + l, 0)),  # x rows
                pl.BlockSpec((Kg, Dg), lambda l, b: (0, 0)),            # weights (resident)
                pl.BlockSpec((lt, Dg), lambda l, b: (l, 0)),            # pe: once per seq tile
            ],
            out_specs=pl.BlockSpec((lt, Dg), lambda l, b: (b * n_l + l, 0)),
        ),
        compiler_params=pltpu.CompilerParams(**cp_kwargs),
        cost_estimate=cost,
    )(x3g, wg, pe_g)

    out = out.reshape(B, L_pad, D)                                      # bit-identical reshape
    return out[:, :L, :] if L_pad != L else out


def make_positional_embedding(seq_len, d_model):
    position = jnp.arange(seq_len, dtype=jnp.float32)[:, None]
    div_term = jnp.exp(
        jnp.arange(0, d_model, 2, dtype=jnp.float32) * -(math.log(10000.0) / d_model))
    pe = jnp.zeros((seq_len, d_model), dtype=jnp.float32)
    pe = pe.at[:, 0::2].set(jnp.sin(position * div_term))
    pe = pe.at[:, 1::2].set(jnp.cos(position * div_term))
    return pe


def reference(x, conv_weight, conv_bias, pe):
    """Pure-JAX reference of FNetEmbedding.forward (x: [B, L, C])."""
    x_m1 = jnp.roll(x, 1, axis=1)
    x_p1 = jnp.roll(x, -1, axis=1)
    w = jnp.transpose(conv_weight, (2, 1, 0))                           # [3, C, D]
    out = x_m1 @ w[0] + x @ w[1] + x_p1 @ w[2] + conv_bias[None, None, :]
    return out + pe[None, :, :]


def _make_params(key, B, L, C, D):
    kx, kw, kb = jax.random.split(key, 3)
    x = jax.random.normal(kx, (B, L, C), dtype=jnp.float32)
    fan_in = C * 3
    gain = math.sqrt(2.0 / (1.0 + 0.01 ** 2))
    std = gain / math.sqrt(fan_in)
    conv_weight = std * jax.random.normal(kw, (D, C, 3), dtype=jnp.float32)
    bound = 1.0 / math.sqrt(fan_in)
    conv_bias = jax.random.uniform(kb, (D,), minval=-bound, maxval=bound, dtype=jnp.float32)
    pe = make_positional_embedding(L, D)
    return x, conv_weight, conv_bias, pe


if __name__ == "__main__":
    key = jax.random.PRNGKey(0)
    configs = [
        (2, 16, 4, 32),   # original small test shape (ungrouped, aligned-L path)
        (2, 32, 4, 32),   # d_model < 128 -> lane-dense G=4 row-grouped path
        (2, 13, 4, 32),   # unaligned seq_len -> padded-L path
    ]
    for i, (B, L, C, D) in enumerate(configs):
        key, sub = jax.random.split(key)
        x, cw, cb, pe = _make_params(sub, B, L, C, D)
        out = jax.block_until_ready(fnet_embedding(x, cw, cb, pe))
        ref = reference(x, cw, cb, pe)
        assert out.shape == (B, L, D), (out.shape, (B, L, D))
        assert jnp.allclose(out, ref, atol=1e-4, rtol=1e-4), f"mismatch vs reference (config {i})"
    print("KERNEL_OK")
</pallas_src>

<mosaic_0001>
module attributes {stable_mosaic.version = 11 : i64} {
  func.func @_fnet_embed_kernel(%arg0: i32, %arg1: i32, %arg2: memref<16x12xf32, #tpu.memory_space<vmem>>, %arg3: memref<12x32xf32, #tpu.memory_space<vmem>>, %arg4: memref<16x32xf32, #tpu.memory_space<vmem>>, %arg5: memref<16x32xf32, #tpu.memory_space<vmem>>) attributes {dimension_semantics = [#tpu.dimension_semantics<parallel>, #tpu.dimension_semantics<parallel>], iteration_bounds = array<i64: 1, 2>, scalar_prefetch = 0 : i64, scratch_operands = 0 : i64, tpu.core_type = #tpu.core_type<tc>, window_params = [{transform_indices = @transform_0, window_bounds = array<i64: 16, 12>}, {pipeline_mode = #tpu.pipeline_mode<synchronous>, transform_indices = @transform_1, window_bounds = array<i64: 12, 32>}, {transform_indices = @transform_2, window_bounds = array<i64: 16, 32>}, {transform_indices = @transform_3, window_bounds = array<i64: 16, 32>}]} {
    %c0 = arith.constant 0 : index
    %c0_0 = arith.constant 0 : index
    %0 = vector.load %arg2[%c0, %c0_0] : memref<16x12xf32, #tpu.memory_space<vmem>>, vector<16x12xf32>
    %c0_1 = arith.constant 0 : index
    %c0_2 = arith.constant 0 : index
    %1 = vector.load %arg3[%c0_1, %c0_2] : memref<12x32xf32, #tpu.memory_space<vmem>>, vector<12x32xf32>
    %cst = arith.constant dense<0.000000e+00> : vector<16x32xf32>
    %2 = tpu.matmul %0, %1, %cst {dimension_numbers = #tpu.dot_dimension_numbers<[1], [0], [0], [1], [0, 0, 1, 1], [], []>} : vector<16x12xf32>, vector<12x32xf32>, vector<16x32xf32> -> vector<16x32xf32>
    %c0_3 = arith.constant 0 : index
    %c0_4 = arith.constant 0 : index
    %3 = vector.load %arg4[%c0_3, %c0_4] : memref<16x32xf32, #tpu.memory_space<vmem>>, vector<16x32xf32>
    %4 = arith.addf %2, %3 : vector<16x32xf32>
    %c0_5 = arith.constant 0 : index
    %c0_6 = arith.constant 0 : index
    %5 = vector.load %arg5[%c0_5, %c0_6] : memref<16x32xf32, #tpu.memory_space<vmem>>, vector<16x32xf32>
    tpu.vector_store %arg5[%c0_5, %c0_6], %4 {strides = array<i32>} : memref<16x32xf32, #tpu.memory_space<vmem>>, vector<16x32xf32>,
    return
  }
  func.func @transform_0(%arg0: i32, %arg1: i32) -> (i32, i32) {
    %c1_i32 = arith.constant 1 : i32
    %0 = arith.muli %arg1, %c1_i32 : i32
    %1 = arith.addi %0, %arg0 : i32
    %c0_i32 = arith.constant 0 : i32
    %c0_i32_0 = arith.constant 0 : i32
    return %1, %c0_i32 : i32, i32
  }
  func.func @transform_1(%arg0: i32, %arg1: i32) -> (i32, i32) {
    %c0_i32 = arith.constant 0 : i32
    %c0_i32_0 = arith.constant 0 : i32
    %c0_i32_1 = arith.constant 0 : i32
    return %c0_i32, %c0_i32_0 : i32, i32
  }
  func.func @transform_2(%arg0: i32, %arg1: i32) -> (i32, i32) {
    %c0_i32 = arith.constant 0 : i32
    %c0_i32_0 = arith.constant 0 : i32
    return %arg0, %c0_i32 : i32, i32
  }
  func.func @transform_3(%arg0: i32, %arg1: i32) -> (i32, i32) {
    %c1_i32 = arith.constant 1 : i32
    %0 = arith.muli %arg1, %c1_i32 : i32
    %1 = arith.addi %0, %arg0 : i32
    %c0_i32 = arith.constant 0 : i32
    %c0_i32_0 = arith.constant 0 : i32
    return %1, %c0_i32 : i32, i32
  }
}

</mosaic_0001>

<llo_original>
// kernel: tpu_custom_call.1
$region0: #{tpu_custom_call.1}
  #allocation0 [shape = 'u32[]', space=smem, size = 0x4, offset = 0x4, fixed_abs, tag = 'smem constant byte address 0x4 - core index']
  #allocation1 [shape = 'u32[144,128]{1,0:T(1,128)}', space=vmem, size = 0x12000, scoped, tag = 'internal scratch']
  %s0 = inlined_call_operand.vmem [shape: f32[32,12], index: 0, kind: input, shape index: {}]
  %s1 = inlined_call_operand.vmem [shape: f32[12,32], index: 1, kind: input, shape index: {}]
  %s2 = inlined_call_operand.vmem [shape: f32[16,32], index: 2, kind: input, shape index: {}]
  %s3 = inlined_call_operand.hbm [shape: f32[32,32], index: 3, kind: output, shape index: {}]
  %s4 = sld [smem:[#allocation0]]
  $region45: #{tpu_custom_call.1} parent=0
    _
  %s6 = ssub.s32 1, %s4
  %s7 = scalar_select 0, %s6, %s4
  $region1: #{tpu_custom_call.1} parent=0
    #allocation2 [shape = 'u8[16384]{0}', space=vmem, size = 0x4000, scoped, tag = 'output window, operand 0']
    #allocation3 [shape = 's32[2]{0}', space=sflag, size = 0x8, scoped, tag = 'scoped memory for tpu_custom_call.1']
    %8 = vsyncpa [#allocation3], 0
    %s9 = scalar_lea.sflag [#allocation3], 1
    %10 = vsyncpa %s9, 0
    loop: start=0, step=1, limit=4
    $region2: #{tpu_custom_call.1} parent=1 // loop_pre_header
      _
    $region3: #{tpu_custom_call.1} parent=1 // loop_header
      %s12 = sphi 0, %s16
      %p13 = scmp.ge.s32.totalorder %s12, 4
      %s19 = sphi 0, %s31
      %s20 = sphi 0, %s27
      %s21 = sphi 0, %s19
      %s22 = sphi 0, %s20
      %s23 = sphi 0, %s21
      %s24 = sphi 0, %s22
      %s36 = sphi 0, %s38
      %s39 = sphi 0, %s36
      %s40 = sphi 0, %s39
      %s56 = sphi 0, %s40
      %s60 = sphi 0, %s60
      %s62 = sphi 0, %s60
      %s63 = sphi 0, %s62
      %s77 = sphi 0, %s63
      %s83 = sphi 0, %s85
      %s86 = sphi 0, %s83
      %s87 = sphi 0, %s86
      %s103 = sphi 0, %s87
      %s111 = sphi 0, %s113
      %s114 = sphi 0, %s111
      %s115 = sphi 0, %s114
      %s131 = sphi 0, %s115
    $region4: #{tpu_custom_call.1} parent=1 // loop_header_branch
      %15 = sbr.rel (%p13) target = $region8
    $region5: #{tpu_custom_call.1} parent=1 // loop_body
      %s17 = ssub.s32 %s12, 1
      %s18 = ssub.s32 %s12, 2
      %s25 = sadd.s32 1, %s20
      %p26 = scmp.ge.s32.totalorder %s25, 2
      %s27 = scalar_select %p26, 0, %s25
      %s28 = sadd.s32 1, %s19
      %s29 = scalar_select %p26, %s28, %s19
      %p30 = scmp.ge.s32.totalorder %s29, 1
      %s31 = scalar_select %p30, 0, %s29
      %s32 = sadd.s32 %s20, %s19
      %s33 = sadd.s32 %s27, %s31
      %s34 = ssub.s32 %s32, %s33
      %p35 = scmp.eq.s32.totalorder %s34, 0
      %s37 = sadd.s32 %s36, 1
      %s38 = scalar_select %p35, %s36, %s37
      %p41 = pneg %p35
      %p42 = scmp.eq.s32.totalorder %s12, 1
      %p43 = por %p41, %p42
      %p44 = scmp.ne.s32.totalorder %s36, %s39
      %p45 = scmp.eq.s32.totalorder %s12, 0
      %p46 = por %p44, %p45
      %p47 = scmp.ne.s32.totalorder %s36, %s39
      %p48 = scmp.eq.s32.totalorder %s17, 1
      %p49 = por %p47, %p48
      %p50 = scmp.ne.s32.totalorder %s39, %s40
      %p51 = scmp.eq.s32.totalorder %s17, 0
      %p52 = por %p50, %p51
      %p53 = scmp.ne.s32.totalorder %s39, %s40
      %p54 = scmp.eq.s32.totalorder %s18, 1
      %p55 = por %p53, %p54
      %p57 = scmp.ne.s32.totalorder %s40, %s56
      %p58 = scmp.eq.s32.totalorder %s18, 0
      %p59 = por %p57, %p58
      %s61 = sadd.s32 %s60, 1
      %p64 = scmp.eq.s32.totalorder %s12, 1
      %p65 = scmp.ne.s32.totalorder %s60, %s62
      %p66 = scmp.eq.s32.totalorder %s12, 0
      %p67 = por %p65, %p66
      %p68 = scmp.ne.s32.totalorder %s60, %s62
      %p69 = scmp.eq.s32.totalorder %s17, 1
      %p70 = por %p68, %p69
      %p71 = scmp.ne.s32.totalorder %s62, %s63
      %p72 = scmp.eq.s32.totalorder %s17, 0
      %p73 = por %p71, %p72
      %p74 = scmp.ne.s32.totalorder %s62, %s63
      %p75 = scmp.eq.s32.totalorder %s18, 1
      %p76 = por %p74, %p75
      %p78 = scmp.ne.s32.totalorder %s63, %s77
      %p79 = scmp.eq.s32.totalorder %s18, 0
      %p80 = por %p78, %p79
      %s81 = ssub.s32 %s19, %s31
      %p82 = scmp.eq.s32.totalorder %s81, 0
      %s84 = sadd.s32 %s83, 1
      %s85 = scalar_select %p82, %s83, %s84
      %p88 = pneg %p82
      %p89 = scmp.eq.s32.totalorder %s12, 1
      %p90 = por %p88, %p89
      %p91 = scmp.ne.s32.totalorder %s83, %s86
      %p92 = scmp.eq.s32.totalorder %s12, 0
      %p93 = por %p91, %p92
      %p94 = scmp.ne.s32.totalorder %s83, %s86
      %p95 = scmp.eq.s32.totalorder %s17, 1
      %p96 = por %p94, %p95
      %p97 = scmp.ne.s32.totalorder %s86, %s87
      %p98 = scmp.eq.s32.totalorder %s17, 0
      %p99 = por %p97, %p98
      %p100 = scmp.ne.s32.totalorder %s86, %s87
      %p101 = scmp.eq.s32.totalorder %s18, 1
      %p102 = por %p100, %p101
      %p104 = scmp.ne.s32.totalorder %s87, %s103
      %p105 = scmp.eq.s32.totalorder %s18, 0
      %p106 = por %p104, %p105
      %s107 = sadd.s32 %s20, %s19
      %s108 = sadd.s32 %s27, %s31
      %s109 = ssub.s32 %s107, %s108
      %p110 = scmp.eq.s32.totalorder %s109, 0
      %s112 = sadd.s32 %s111, 1
      %s113 = scalar_select %p110, %s111, %s112
      %p116 = pneg %p110
      %p117 = scmp.eq.s32.totalorder %s12, 1
      %p118 = por %p116, %p117
      %p119 = scmp.ne.s32.totalorder %s111, %s114
      %p120 = scmp.eq.s32.totalorder %s12, 0
      %p121 = por %p119, %p120
      %p122 = scmp.ne.s32.totalorder %s111, %s114
      %p123 = scmp.eq.s32.totalorder %s17, 1
      %p124 = por %p122, %p123
      %p125 = scmp.ne.s32.totalorder %s114, %s115
      %p126 = scmp.eq.s32.totalorder %s17, 0
      %p127 = por %p125, %p126
      %p128 = scmp.ne.s32.totalorder %s114, %s115
      %p129 = scmp.eq.s32.totalorder %s18, 1
      %p130 = por %p128, %p129
      %p132 = scmp.ne.s32.totalorder %s115, %s131
      %p133 = scmp.eq.s32.totalorder %s18, 0
      %p134 = por %p132, %p133
      %p135 = scmp.le.s32.totalorder 1, %s12
      %p136 = scmp.lt.s32.totalorder %s12, 3
      %p137 = pnand %p135, %p136
      %p138 = pneg %p137
      // Predicated region
      $region9: #{tpu_custom_call.1} parent=5 // pred_check
        _
      $region10: #{tpu_custom_call.1} parent=5 // pred_check_branch
        %140 = sbr.rel (%p137) target = $region12
      $region11: #{tpu_custom_call.1} parent=5 // pred_region
        %s141 = ssub.s32 %s12, 1
        // Predicated region
        $region13: #{tpu_custom_call.1} parent=11 // pred_check
          %p142 = pneg %p73
        $region14: #{tpu_custom_call.1} parent=11 // pred_check_branch
          %144 = sbr.rel (%p142) target = $region16
        $region15: #{tpu_custom_call.1} parent=11 // pred_region
          _
        $region16: #{tpu_custom_call.1} parent=11 // pred_fallthru
          _
        // Predicated region
        $region17: #{tpu_custom_call.1} parent=11 // pred_check
          %p145 = pneg %p99
        $region18: #{tpu_custom_call.1} parent=11 // pred_check_branch
          %147 = sbr.rel (%p145) target = $region20
        $region19: #{tpu_custom_call.1} parent=11 // pred_region
          %s148 = smul.u32 2, %s21
          %p149 = scmp.lt.s32.totalorder %s148, 1
          %s150 = scalar_select %p149, %s148, 1
          %s151 = smul.addr %s150, 8
          %s152 = scalar_lea.vmem %s2, %s151
          %s153 = smul.u32 2, %s21
        $region20: #{tpu_custom_call.1} parent=11 // pred_fallthru
          _
      $region12: #{tpu_custom_call.1} parent=5 // pred_fallthru
        _
      %p154 = scmp.lt.s32.totalorder %s12, 2
      // Predicated region
      $region21: #{tpu_custom_call.1} parent=5 // pred_check
        %p155 = pneg %p154
      $region22: #{tpu_custom_call.1} parent=5 // pred_check_branch
        %157 = sbr.rel (%p155) target = $region24
      $region23: #{tpu_custom_call.1} parent=5 // pred_region
        // Predicated region
        $region25: #{tpu_custom_call.1} parent=23 // pred_check
          %p158 = pneg %p46
        $region26: #{tpu_custom_call.1} parent=23 // pred_check_branch
          %160 = sbr.rel (%p158) target = $region28
        $region27: #{tpu_custom_call.1} parent=23 // pred_region
          %s161 = sadd.s32 %s20, %s19
          %s162 = smul.u32 2, %s161
          %p163 = scmp.lt.s32.totalorder %s162, 3
          %s164 = scalar_select %p163, %s162, 3
          %s165 = smul.addr %s164, 8
          %s166 = scalar_lea.vmem %s0, %s165
          %s167 = sadd.s32 %s20, %s19
          %s168 = smul.u32 2, %s167
        $region28: #{tpu_custom_call.1} parent=23 // pred_fallthru
          _
      $region24: #{tpu_custom_call.1} parent=5 // pred_fallthru
        _
      %p169 = scmp.le.s32.totalorder 1, %s12
      %p170 = scmp.lt.s32.totalorder %s12, 3
      %p171 = pnand %p169, %p170
      %p172 = pneg %p171
      // Predicated region
      $region29: #{tpu_custom_call.1} parent=5 // pred_check
        _
      $region30: #{tpu_custom_call.1} parent=5 // pred_check_branch
        %174 = sbr.rel (%p171) target = $region32
      $region31: #{tpu_custom_call.1} parent=5 // pred_region
        %s175 = ssub.s32 %s12, 1
        %s176 = sadd.s32 %s22, %s21
        %s177 = smul.u32 2, %s176
        %p178 = scmp.lt.s32.totalorder %s177, 3
        %s179 = scalar_select %p178, %s177, 3
        %s180 = smul.addr %s179, 8
        %s181 = scalar_lea.vmem %s0, %s180
        %p182 = pneg %p52
        %p183 = pneg %p49
        %p184 = pneg %p73
        %p185 = pneg %p70
        %s186 = smul.u32 2, %s21
        %p187 = scmp.lt.s32.totalorder %s186, 1
        %s188 = scalar_select %p187, %s186, 1
        %s189 = smul.addr %s188, 8
        %s190 = scalar_lea.vmem %s2, %s189
        %p191 = pneg %p99
        %p192 = pneg %p96
        %p193 = pneg %p127
        %p194 = pneg %p124
        %s195 = sand.u32 %s114, 1
        %s196 = scalar_lea.sflag [#allocation3], %s195
        %s197 = sand.u32 %s114, 1
        %s198 = smul.addr %s197, 16
        %s199 = scalar_lea.vmem [#allocation2], %s198
        %s200 = sadd.s32 %s22, %s21
        %s201 = smul.u32 2, %s200
        %p202 = scmp.lt.s32.totalorder %s201, 3
        %s203 = scalar_select %p202, %s201, 3
        %s204 = smul.addr %s203, 8
        %s205 = scalar_lea.vmem %s0, %s204
        %s206 = sadd.s32 %s22, %s21
        %s207 = smul.u32 2, %s206
        %s208 = smul.u32 2, %s21
        %p209 = scmp.lt.s32.totalorder %s208, 1
        %s210 = scalar_select %p209, %s208, 1
        %s211 = smul.addr %s210, 8
        %s212 = scalar_lea.vmem %s2, %s211
        %s213 = smul.u32 2, %s21
        %s214 = sadd.s32 %s22, %s21
        %s215 = smul.u32 2, %s214
        %v216 = vld [vmem:[%s205] sm:$0xff]
        %v217 = vld [vmem:[%s205 + $0x8] sm:$0xff]
        %v218 = vld [vmem:[%s1] sm:$0xff]
        %v219 = vld [vmem:[%s1 + $0x8] sm:$0xf]
        %v220 = vld [vmem:[%s212] sm:$0xff]
        %v221 = vld [vmem:[%s212 + $0x8] sm:$0xff]
        %vm222 = vcmask 97280
        %v224 = vsel %vm222, %v216, 0
        %v227 = vsel %vm222, %v217, 0
        %vm229 = vcmask 1043456
        %v231 = vsel %vm229, %v219, 0
        %233 = vmatprep.subr.mxu0 0.0
        %234 = vmatpush1.msra.mxu0 0.0
        %235 = vmatprep.subr.mxu0 0.0
        %236 = vmatpush1.msra.mxu0 0.0
        %237 = vmatprep.subr.mxu0 0.0
        %238 = vmatpush1.msra.mxu0 0.0
        %239 = vmatprep.subr.mxu0 0.0
        %240 = vmatpush1.msra.mxu0 0.0
        %241 = vmatprep.subr.mxu0 0.0
        %242 = vmatpush1.msra.mxu0 0.0
        %243 = vmatprep.subr.mxu0 0.0
        %244 = vmatpush1.msra.mxu0 0.0
        %245 = vmatprep.subr.mxu0 0.0
        %246 = vmatpush1.msra.mxu0 0.0
        %247 = vmatprep.subr.mxu0 0.0
        %248 = vmatpush1.msra.mxu0 0.0
        %249 = vmatprep.subr.mxu0 0.0
        %250 = vmatpush1.msra.mxu0 0.0
        %251 = vmatprep.subr.mxu0 0.0
        %252 = vmatpush1.msra.mxu0 0.0
        %253 = vmatprep.subr.mxu0 0.0
        %254 = vmatpush1.msra.mxu0 0.0
        %255 = vmatprep.subr.mxu0 0.0
        %256 = vmatpush1.msra.mxu0 0.0
        %257 = vmatprep.subr.mxu0 0.0
        %258 = vmatpush1.msra.mxu0 0.0
        %259 = vmatprep.subr.mxu0 0.0
        %260 = vmatpush1.msra.mxu0 0.0
        %261 = vmatprep.subr.mxu0 0.0
        %262 = vmatpush1.msra.mxu0 %v231
        %263 = vmatprep.subr.mxu0 0.0
        %264 = vmatpush1.msra.mxu0 %v218
        %265 = vmatprep.subr.mxu0 0.0
        %266 = vmatpush2.msra.mxu0 0.0
        %267 = vmatprep.subr.mxu0 0.0
        %268 = vmatpush2.msra.mxu0 0.0
        %269 = vmatprep.subr.mxu0 0.0
        %270 = vmatpush2.msra.mxu0 0.0
        %271 = vmatprep.subr.mxu0 0.0
        %272 = vmatpush2.msra.mxu0 0.0
        %273 = vmatprep.subr.mxu0 0.0
        %274 = vmatpush2.msra.mxu0 0.0
        %275 = vmatprep.subr.mxu0 0.0
        %276 = vmatpush2.msra.mxu0 0.0
        %277 = vmatprep.subr.mxu0 0.0
        %278 = vmatpush2.msra.mxu0 0.0
        %279 = vmatprep.subr.mxu0 0.0
        %280 = vmatpush2.msra.mxu0 0.0
        %281 = vmatprep.subr.mxu0 0.0
        %282 = vmatpush2.msra.mxu0 0.0
        %283 = vmatprep.subr.mxu0 0.0
        %284 = vmatpush2.msra.mxu0 0.0
        %285 = vmatprep.subr.mxu0 0.0
        %286 = vmatpush2.msra.mxu0 0.0
        %287 = vmatprep.subr.mxu0 0.0
        %288 = vmatpush2.msra.mxu0 0.0
        %289 = vmatprep.subr.mxu0 0.0
        %290 = vmatpush2.msra.mxu0 0.0
        %291 = vmatprep.subr.mxu0 0.0
        %292 = vmatpush2.msra.mxu0 0.0
        %293 = vmatprep.subr.mxu0 0.0
        %294 = vmatpush2.msra.mxu0 0.0
        %295 = vmatprep.subr.mxu0 0.0
        %296 = vmatpush2.msra.mxu0 0.0
        %297 = vmatprep.mubr.f32.mxu0 0.0
        %298 = vmatmul.mubr.f32.gmra.mxu0 %v224
        %v299 = vpop.f32.mrf.mxu0
        %v300 = vadd.f32 %v220, %v299
        %v301 = vpop.f32.mrf.mxu0
        %302 = vmatprep.mubr.f32.mxu0 0.0
        %303 = vmatmul.mubr.f32.gmra.mxu0 %v227
        %v304 = vpop.f32.mrf.mxu0
        %v305 = vadd.f32 %v221, %v304
        %v306 = vpop.f32.mrf.mxu0
        %307 = vdwg.mxu0
        %vm308 = vcmask 261120
        %309 = vst.msk [vmem:[%s199] sm:$0xff] %vm308, %v300
        %310 = vst.msk [vmem:[%s199 + $0x8] sm:$0xff] %vm308, %v305
        %s311 = sand.u32 %s114, 1
        %s312 = scalar_lea.sflag [#allocation3], %s311
        %s313 = sand.u32 %s114, 1
        %s314 = smul.addr %s313, 16
        %s315 = scalar_lea.vmem [#allocation2], %s314
        // Predicated region
        $region33: #{tpu_custom_call.1} parent=31 // pred_check
          %p316 = pneg %p124
        $region34: #{tpu_custom_call.1} parent=31 // pred_check_branch
          %318 = sbr.rel (%p316) target = $region36
        $region35: #{tpu_custom_call.1} parent=31 // pred_region
          %s319 = sadd.s32 %s22, %s21
          %s320 = smul.u32 2, %s319
          %s322 = ssub.s32 256, 256
          %323 = vsyncadd %s312, %s322
          %s324 = smul.addr %s320, 128
          %s325 = scalar_lea.hbm %s3, %s324
          %s326 = sshll.u32 %s315, 4
          %s327 = int_to_ptr.vmem [resolvable:$true] %s326
          %332 = dma.vmem_to_hbm [thread:$0]  %s327, 256, %s325, %s312, 128, 128, 8
        $region36: #{tpu_custom_call.1} parent=31 // pred_fallthru
          _
      $region32: #{tpu_custom_call.1} parent=5 // pred_fallthru
        _
      %p333 = scmp.le.s32.totalorder 2, %s12
      // Predicated region
      $region37: #{tpu_custom_call.1} parent=5 // pred_check
        %p334 = pneg %p333
      $region38: #{tpu_custom_call.1} parent=5 // pred_check_branch
        %336 = sbr.rel (%p334) target = $region40
      $region39: #{tpu_custom_call.1} parent=5 // pred_region
        %s337 = ssub.s32 %s12, 2
        // Predicated region
        $region41: #{tpu_custom_call.1} parent=39 // pred_check
          %p338 = pneg %p130
        $region42: #{tpu_custom_call.1} parent=39 // pred_check_branch
          %340 = sbr.rel (%p338) target = $region44
        $region43: #{tpu_custom_call.1} parent=39 // pred_region
          %s341 = sand.u32 %s115, 1
          %s342 = scalar_lea.sflag [#allocation3], %s341
          %s343 = sand.u32 %s115, 1
          %s344 = smul.addr %s343, 16
          %s345 = scalar_lea.vmem [#allocation2], %s344
          %346 = dma.done %s342, 256
        $region44: #{tpu_custom_call.1} parent=39 // pred_fallthru
          _
      $region40: #{tpu_custom_call.1} parent=5 // pred_fallthru
        _
    $region6: #{tpu_custom_call.1} parent=1 // loop_footer
      %s16 = sadd.s32 1, %s12
    $region7: #{tpu_custom_call.1} parent=1 // loop_footer_branch
      %11 = sbr.rel target = $region3
    $region8: #{tpu_custom_call.1} parent=1 // loop_exit
      _
    %347 = vsyncpa [#allocation3], 1
    %s348 = scalar_lea.sflag [#allocation3], 1
    %349 = vsyncpa %s348, 1

</llo_original>
